<compile_context>
chip_gen: v7x
topology: tpu7x:2x2x1
jax: 0.10.0
libtpu: 0.0.40
codegen_flags: <defaults>
</compile_context>

<pallas_src>
import functools

import jax
import jax.numpy as jnp
from jax.experimental import pallas as pl
from jax.experimental.pallas import tpu as pltpu


def _cc_pool_kernel(w_ref, b_ref, x_ref, o_ref, *, use_mxu):
    # w_ref: (C_out, C_in) f32   b_ref: (C_out, 1) f32
    # x_ref: (1, C_in, TL)       o_ref: (1, C_out, TL)
    x = x_ref[0]                      # (C_in, TL)
    w = w_ref[...]                    # (C_out, C_in) f32
    b = b_ref[...]                    # (C_out, 1)   f32

    if use_mxu:
        # Large channel counts: channel-mixing matmul on the MXU, f32 acc.
        # Cast the weight to the activation dtype so bf16 inputs use the fast
        # bf16 MXU path (accumulation stays f32 via preferred_element_type).
        acc = jnp.dot(w.astype(x.dtype), x, preferred_element_type=jnp.float32)
    else:
        # Tiny channel counts: rank-1 (outer-product) accumulation on the VPU.
        # (C_out, 1) * (1, TL) broadcasts to a dense (C_out, TL) tile; the MXU
        # stays idle and per-step latency drops.
        xf = x.astype(jnp.float32)
        acc = w[:, 0:1] * xf[0:1, :]
        for ci in range(1, x.shape[0]):
            acc = acc + w[:, ci:ci + 1] * xf[ci:ci + 1, :]

    o_ref[0] = (acc + b).astype(o_ref.dtype)


def _choose_lane_tile(dhw, c_in, c_out, itemsize,
                      max_tile=32768, vmem_budget=24 * 1024 * 1024):
    """Pick the lane tile TL and number of lane blocks.

    Caps TL so the double-buffered (in + out) blocks stay under the scoped-VMEM
    limit we request (32 MiB), which is safe even on v7x (64 MiB physical).
    """
    per_col = 2 * (c_in + c_out) * itemsize       # double-buffered bytes / lane
    cap = max(128, (vmem_budget // per_col) // 128 * 128)
    tl = min(max_tile, cap)
    if dhw <= tl:
        # One block spanning the full spatial dim; a block dim equal to the
        # full array dim is always layout-legal (no 128-divisibility needed).
        return dhw, 1
    tl = max(128, (tl // 128) * 128)              # lane dim: multiple of 128
    return tl, pl.cdiv(dhw, tl)                   # ragged tail masked by Pallas


def cross_channel_pool(x, weight, bias):
    """x: (N, C_in, D, H, W); weight: (C_out, C_in); bias: (C_out,)."""
    N, C_in, D, H, W = x.shape
    C_out = weight.shape[0]
    DHW = D * H * W

    # Free view: NCDHW is contiguous, so (N, C_in, DHW) costs no HBM traffic.
    x3 = x.reshape(N, C_in, DHW)
    w = weight.astype(jnp.float32)
    b = bias.reshape(C_out, 1).astype(jnp.float32)

    TL, num_l = _choose_lane_tile(DHW, C_in, C_out, x.dtype.itemsize)
    use_mxu = (C_in >= 64 and C_out >= 64)

    kernel = functools.partial(_cc_pool_kernel, use_mxu=use_mxu)

    cost = pl.CostEstimate(
        flops=2 * N * DHW * C_in * C_out,
        transcendentals=0,
        bytes_accessed=N * DHW * (C_in + C_out) * x.dtype.itemsize
        + w.size * 4 + b.size * 4,
    )

    out3 = pl.pallas_call(
        kernel,
        out_shape=jax.ShapeDtypeStruct((N, C_out, DHW), x.dtype),
        grid_spec=pltpu.PrefetchScalarGridSpec(
            num_scalar_prefetch=0,
            grid=(N, num_l),
            in_specs=[
                pl.BlockSpec((C_out, C_in), lambda n, l: (0, 0)),   # weight
                pl.BlockSpec((C_out, 1), lambda n, l: (0, 0)),      # bias
                pl.BlockSpec((1, C_in, TL), lambda n, l: (n, 0, l)),
            ],
            out_specs=pl.BlockSpec((1, C_out, TL), lambda n, l: (n, 0, l)),
        ),
        compiler_params=pltpu.CompilerParams(
            dimension_semantics=("parallel", "parallel"),
            vmem_limit_bytes=32 * 1024 * 1024,
        ),
        cost_estimate=cost,
    )(w, b, x3)

    # Free view back to NCDHW.
    return out3.reshape(N, C_out, D, H, W)


def init_params(in_channels, out_channels, key):
    # Conv3d weight filled with 0.5 as in the module's __init__.
    weight = jnp.full((out_channels, in_channels), 0.5, dtype=jnp.float32)
    # Conv3d default bias init: uniform(-k, k), k = 1/sqrt(fan_in * 1*1*1)
    k = 1.0 / jnp.sqrt(jnp.float32(in_channels))
    bias = jax.random.uniform(key, (out_channels,), jnp.float32, -k, k)
    return weight, bias


def _reference(x, weight, bias):
    return (jnp.einsum("ncdhw,oc->nodhw", x, weight)
            + bias[None, :, None, None, None])


if __name__ == "__main__":
    key = jax.random.PRNGKey(0)
    kx, kb, kx2, kw2, kb2 = jax.random.split(key, 5)

    # Small-channel case (VPU path), matching the module's typical use.
    N, C_in, C_out, D, H, W = 2, 4, 8, 4, 8, 8
    x = jax.random.normal(kx, (N, C_in, D, H, W), dtype=jnp.float32)
    weight, bias = init_params(C_in, C_out, kb)

    y = cross_channel_pool(x, weight, bias)
    y = jax.block_until_ready(y)

    ref = _reference(x, weight, bias)
    assert y.shape == (N, C_out, D, H, W), y.shape
    assert jnp.allclose(y, ref, atol=1e-5, rtol=1e-5), \
        float(jnp.max(jnp.abs(y - ref)))

    # Large-channel case (MXU path) to exercise the other compile branch.
    N2, C2_in, C2_out, D2, H2, W2 = 1, 128, 64, 2, 4, 8
    x2 = jax.random.normal(kx2, (N2, C2_in, D2, H2, W2), dtype=jnp.float32)
    w2 = jax.random.normal(kw2, (C2_out, C2_in), dtype=jnp.float32) * 0.05
    b2 = jax.random.normal(kb2, (C2_out,), dtype=jnp.float32) * 0.1

    y2 = cross_channel_pool(x2, w2, b2)
    y2 = jax.block_until_ready(y2)
    ref2 = _reference(x2, w2, b2)
    assert jnp.allclose(y2, ref2, atol=1e-4, rtol=1e-4), \
        float(jnp.max(jnp.abs(y2 - ref2)))

    print("KERNEL_OK")
</pallas_src>

<mosaic_0001>
module attributes {stable_mosaic.version = 11 : i64} {
  func.func @_cc_pool_kernel(%arg0: i32, %arg1: i32, %arg2: memref<8x4xf32, #tpu.memory_space<vmem>>, %arg3: memref<8x1xf32, #tpu.memory_space<vmem>>, %arg4: memref<1x4x256xf32, #tpu.memory_space<vmem>>, %arg5: memref<1x8x256xf32, #tpu.memory_space<vmem>>) attributes {dimension_semantics = [#tpu.dimension_semantics<parallel>, #tpu.dimension_semantics<parallel>], iteration_bounds = array<i64: 2, 1>, scalar_prefetch = 0 : i64, scratch_operands = 0 : i64, tpu.core_type = #tpu.core_type<tc>, window_params = [{pipeline_mode = #tpu.pipeline_mode<synchronous>, transform_indices = @transform_0, window_bounds = array<i64: 8, 4>}, {pipeline_mode = #tpu.pipeline_mode<synchronous>, transform_indices = @transform_1, window_bounds = array<i64: 8, 1>}, {transform_indices = @transform_2, window_bounds = array<i64: 1, 4, 256>}, {transform_indices = @transform_3, window_bounds = array<i64: 1, 8, 256>}]} {
    %c0 = arith.constant 0 : index
    %c0_0 = arith.constant 0 : index
    %c0_1 = arith.constant 0 : index
    %0 = vector.load %arg4[%c0, %c0_0, %c0_1] : memref<1x4x256xf32, #tpu.memory_space<vmem>>, vector<1x4x256xf32>
    %1 = vector.shape_cast %0 : vector<1x4x256xf32> to vector<4x256xf32>
    %c0_2 = arith.constant 0 : index
    %c0_3 = arith.constant 0 : index
    %2 = vector.load %arg2[%c0_2, %c0_3] : memref<8x4xf32, #tpu.memory_space<vmem>>, vector<8x4xf32>
    %c0_4 = arith.constant 0 : index
    %c0_5 = arith.constant 0 : index
    %3 = vector.load %arg3[%c0_4, %c0_5] : memref<8x1xf32, #tpu.memory_space<vmem>>, vector<8x1xf32>
    %4 = vector.extract_strided_slice %2 {offsets = [0, 0], sizes = [8, 1], strides = [1, 1]} : vector<8x4xf32> to vector<8x1xf32>
    %5 = vector.extract_strided_slice %1 {offsets = [0, 0], sizes = [1, 256], strides = [1, 1]} : vector<4x256xf32> to vector<1x256xf32>
    %6 = vector.broadcast %4 : vector<8x1xf32> to vector<8x256xf32>
    %7 = vector.broadcast %5 : vector<1x256xf32> to vector<8x256xf32>
    %8 = arith.mulf %6, %7 : vector<8x256xf32>
    %9 = vector.extract_strided_slice %2 {offsets = [0, 1], sizes = [8, 1], strides = [1, 1]} : vector<8x4xf32> to vector<8x1xf32>
    %10 = vector.extract_strided_slice %1 {offsets = [1, 0], sizes = [1, 256], strides = [1, 1]} : vector<4x256xf32> to vector<1x256xf32>
    %11 = vector.broadcast %9 : vector<8x1xf32> to vector<8x256xf32>
    %12 = vector.broadcast %10 : vector<1x256xf32> to vector<8x256xf32>
    %13 = arith.mulf %11, %12 : vector<8x256xf32>
    %14 = arith.addf %8, %13 : vector<8x256xf32>
    %15 = vector.extract_strided_slice %2 {offsets = [0, 2], sizes = [8, 1], strides = [1, 1]} : vector<8x4xf32> to vector<8x1xf32>
    %16 = vector.extract_strided_slice %1 {offsets = [2, 0], sizes = [1, 256], strides = [1, 1]} : vector<4x256xf32> to vector<1x256xf32>
    %17 = vector.broadcast %15 : vector<8x1xf32> to vector<8x256xf32>
    %18 = vector.broadcast %16 : vector<1x256xf32> to vector<8x256xf32>
    %19 = arith.mulf %17, %18 : vector<8x256xf32>
    %20 = arith.addf %14, %19 : vector<8x256xf32>
    %21 = vector.extract_strided_slice %2 {offsets = [0, 3], sizes = [8, 1], strides = [1, 1]} : vector<8x4xf32> to vector<8x1xf32>
    %22 = vector.extract_strided_slice %1 {offsets = [3, 0], sizes = [1, 256], strides = [1, 1]} : vector<4x256xf32> to vector<1x256xf32>
    %23 = vector.broadcast %21 : vector<8x1xf32> to vector<8x256xf32>
    %24 = vector.broadcast %22 : vector<1x256xf32> to vector<8x256xf32>
    %25 = arith.mulf %23, %24 : vector<8x256xf32>
    %26 = arith.addf %20, %25 : vector<8x256xf32>
    %27 = vector.broadcast %3 : vector<8x1xf32> to vector<8x256xf32>
    %28 = arith.addf %26, %27 : vector<8x256xf32>
    %c0_6 = arith.constant 0 : index
    %c0_7 = arith.constant 0 : index
    %c0_8 = arith.constant 0 : index
    %29 = vector.load %arg5[%c0_6, %c0_7, %c0_8] : memref<1x8x256xf32, #tpu.memory_space<vmem>>, vector<1x8x256xf32>
    %30 = vector.shape_cast %29 : vector<1x8x256xf32> to vector<8x256xf32>
    %31 = vector.shape_cast %28 : vector<8x256xf32> to vector<1x8x256xf32>
    tpu.vector_store %arg5[%c0_6, %c0_7, %c0_8], %31 {strides = array<i32>} : memref<1x8x256xf32, #tpu.memory_space<vmem>>, vector<1x8x256xf32>,
    return
  }
  func.func @transform_0(%arg0: i32, %arg1: i32) -> (i32, i32) {
    %c0_i32 = arith.constant 0 : i32
    %c0_i32_0 = arith.constant 0 : i32
    %c0_i32_1 = arith.constant 0 : i32
    return %c0_i32, %c0_i32_0 : i32, i32
  }
  func.func @transform_1(%arg0: i32, %arg1: i32) -> (i32, i32) {
    %c0_i32 = arith.constant 0 : i32
    %c0_i32_0 = arith.constant 0 : i32
    %c0_i32_1 = arith.constant 0 : i32
    return %c0_i32, %c0_i32_0 : i32, i32
  }
  func.func @transform_2(%arg0: i32, %arg1: i32) -> (i32, i32, i32) {
    %c0_i32 = arith.constant 0 : i32
    %c0_i32_0 = arith.constant 0 : i32
    return %arg0, %c0_i32, %arg1 : i32, i32, i32
  }
  func.func @transform_3(%arg0: i32, %arg1: i32) -> (i32, i32, i32) {
    %c0_i32 = arith.constant 0 : i32
    %c0_i32_0 = arith.constant 0 : i32
    return %arg0, %c0_i32, %arg1 : i32, i32, i32
  }
}

</mosaic_0001>

<llo_original>
// kernel: tpu_custom_call.1
$region0: #{tpu_custom_call.1}
  #allocation0 [shape = 'u32[]', space=smem, size = 0x4, offset = 0x4, fixed_abs, tag = 'smem constant byte address 0x4 - core index']
  #allocation1 [shape = 'u32[144,128]{1,0:T(1,128)}', space=vmem, size = 0x12000, scoped, tag = 'internal scratch']
  %s0 = inlined_call_operand.vmem [shape: f32[8,4], index: 0, kind: input, shape index: {}]
  %s1 = inlined_call_operand.vmem [shape: f32[8,1], index: 1, kind: input, shape index: {}]
  %s2 = inlined_call_operand.vmem [shape: f32[2,4,256], index: 2, kind: input, shape index: {}]
  %s3 = inlined_call_operand.hbm [shape: f32[2,8,256], index: 3, kind: output, shape index: {}]
  %s4 = sld [smem:[#allocation0]]
  $region45: #{tpu_custom_call.1} parent=0
    _
  %s6 = ssub.s32 1, %s4
  %s7 = scalar_select 0, %s6, %s4
  $region1: #{tpu_custom_call.1} parent=0
    #allocation2 [shape = 'u8[16384]{0}', space=vmem, size = 0x4000, scoped, tag = 'output window, operand 0']
    #allocation3 [shape = 's32[2]{0}', space=sflag, size = 0x8, scoped, tag = 'scoped memory for tpu_custom_call.1']
    %8 = vsyncpa [#allocation3], 0
    %s9 = scalar_lea.sflag [#allocation3], 1
    %10 = vsyncpa %s9, 0
    loop: start=0, step=1, limit=4
    $region2: #{tpu_custom_call.1} parent=1 // loop_pre_header
      _
    $region3: #{tpu_custom_call.1} parent=1 // loop_header
      %s12 = sphi 0, %s16
      %p13 = scmp.ge.s32.totalorder %s12, 4
      %s19 = sphi 0, %s31
      %s20 = sphi 0, %s27
      %s21 = sphi 0, %s19
      %s22 = sphi 0, %s20
      %s23 = sphi 0, %s21
      %s24 = sphi 0, %s22
      %s32 = sphi 0, %s32
      %s34 = sphi 0, %s32
      %s35 = sphi 0, %s34
      %s49 = sphi 0, %s35
      %s53 = sphi 0, %s53
      %s55 = sphi 0, %s53
      %s56 = sphi 0, %s55
      %s70 = sphi 0, %s56
      %s78 = sphi 0, %s80
      %s81 = sphi 0, %s78
      %s82 = sphi 0, %s81
      %s98 = sphi 0, %s82
      %s106 = sphi 0, %s108
      %s109 = sphi 0, %s106
      %s110 = sphi 0, %s109
      %s126 = sphi 0, %s110
    $region4: #{tpu_custom_call.1} parent=1 // loop_header_branch
      %15 = sbr.rel (%p13) target = $region8
    $region5: #{tpu_custom_call.1} parent=1 // loop_body
      %s17 = ssub.s32 %s12, 1
      %s18 = ssub.s32 %s12, 2
      %s25 = sadd.s32 1, %s20
      %p26 = scmp.ge.s32.totalorder %s25, 1
      %s27 = scalar_select %p26, 0, %s25
      %s28 = sadd.s32 1, %s19
      %s29 = scalar_select %p26, %s28, %s19
      %p30 = scmp.ge.s32.totalorder %s29, 2
      %s31 = scalar_select %p30, 0, %s29
      %s33 = sadd.s32 %s32, 1
      %p36 = scmp.eq.s32.totalorder %s12, 1
      %p37 = scmp.ne.s32.totalorder %s32, %s34
      %p38 = scmp.eq.s32.totalorder %s12, 0
      %p39 = por %p37, %p38
      %p40 = scmp.ne.s32.totalorder %s32, %s34
      %p41 = scmp.eq.s32.totalorder %s17, 1
      %p42 = por %p40, %p41
      %p43 = scmp.ne.s32.totalorder %s34, %s35
      %p44 = scmp.eq.s32.totalorder %s17, 0
      %p45 = por %p43, %p44
      %p46 = scmp.ne.s32.totalorder %s34, %s35
      %p47 = scmp.eq.s32.totalorder %s18, 1
      %p48 = por %p46, %p47
      %p50 = scmp.ne.s32.totalorder %s35, %s49
      %p51 = scmp.eq.s32.totalorder %s18, 0
      %p52 = por %p50, %p51
      %s54 = sadd.s32 %s53, 1
      %p57 = scmp.eq.s32.totalorder %s12, 1
      %p58 = scmp.ne.s32.totalorder %s53, %s55
      %p59 = scmp.eq.s32.totalorder %s12, 0
      %p60 = por %p58, %p59
      %p61 = scmp.ne.s32.totalorder %s53, %s55
      %p62 = scmp.eq.s32.totalorder %s17, 1
      %p63 = por %p61, %p62
      %p64 = scmp.ne.s32.totalorder %s55, %s56
      %p65 = scmp.eq.s32.totalorder %s17, 0
      %p66 = por %p64, %p65
      %p67 = scmp.ne.s32.totalorder %s55, %s56
      %p68 = scmp.eq.s32.totalorder %s18, 1
      %p69 = por %p67, %p68
      %p71 = scmp.ne.s32.totalorder %s56, %s70
      %p72 = scmp.eq.s32.totalorder %s18, 0
      %p73 = por %p71, %p72
      %s74 = ssub.s32 %s19, %s31
      %s75 = ssub.s32 %s20, %s27
      %s76 = sor.u32 %s74, %s75
      %p77 = scmp.eq.s32.totalorder %s76, 0
      %s79 = sadd.s32 %s78, 1
      %s80 = scalar_select %p77, %s78, %s79
      %p83 = pneg %p77
      %p84 = scmp.eq.s32.totalorder %s12, 1
      %p85 = por %p83, %p84
      %p86 = scmp.ne.s32.totalorder %s78, %s81
      %p87 = scmp.eq.s32.totalorder %s12, 0
      %p88 = por %p86, %p87
      %p89 = scmp.ne.s32.totalorder %s78, %s81
      %p90 = scmp.eq.s32.totalorder %s17, 1
      %p91 = por %p89, %p90
      %p92 = scmp.ne.s32.totalorder %s81, %s82
      %p93 = scmp.eq.s32.totalorder %s17, 0
      %p94 = por %p92, %p93
      %p95 = scmp.ne.s32.totalorder %s81, %s82
      %p96 = scmp.eq.s32.totalorder %s18, 1
      %p97 = por %p95, %p96
      %p99 = scmp.ne.s32.totalorder %s82, %s98
      %p100 = scmp.eq.s32.totalorder %s18, 0
      %p101 = por %p99, %p100
      %s102 = ssub.s32 %s19, %s31
      %s103 = ssub.s32 %s20, %s27
      %s104 = sor.u32 %s102, %s103
      %p105 = scmp.eq.s32.totalorder %s104, 0
      %s107 = sadd.s32 %s106, 1
      %s108 = scalar_select %p105, %s106, %s107
      %p111 = pneg %p105
      %p112 = scmp.eq.s32.totalorder %s12, 1
      %p113 = por %p111, %p112
      %p114 = scmp.ne.s32.totalorder %s106, %s109
      %p115 = scmp.eq.s32.totalorder %s12, 0
      %p116 = por %p114, %p115
      %p117 = scmp.ne.s32.totalorder %s106, %s109
      %p118 = scmp.eq.s32.totalorder %s17, 1
      %p119 = por %p117, %p118
      %p120 = scmp.ne.s32.totalorder %s109, %s110
      %p121 = scmp.eq.s32.totalorder %s17, 0
      %p122 = por %p120, %p121
      %p123 = scmp.ne.s32.totalorder %s109, %s110
      %p124 = scmp.eq.s32.totalorder %s18, 1
      %p125 = por %p123, %p124
      %p127 = scmp.ne.s32.totalorder %s110, %s126
      %p128 = scmp.eq.s32.totalorder %s18, 0
      %p129 = por %p127, %p128
      %p130 = scmp.le.s32.totalorder 1, %s12
      %p131 = scmp.lt.s32.totalorder %s12, 3
      %p132 = pnand %p130, %p131
      %p133 = pneg %p132
      // Predicated region
      $region9: #{tpu_custom_call.1} parent=5 // pred_check
        _
      $region10: #{tpu_custom_call.1} parent=5 // pred_check_branch
        %135 = sbr.rel (%p132) target = $region12
      $region11: #{tpu_custom_call.1} parent=5 // pred_region
        %s136 = ssub.s32 %s12, 1
        // Predicated region
        $region13: #{tpu_custom_call.1} parent=11 // pred_check
          %p137 = pneg %p45
        $region14: #{tpu_custom_call.1} parent=11 // pred_check_branch
          %139 = sbr.rel (%p137) target = $region16
        $region15: #{tpu_custom_call.1} parent=11 // pred_region
          _
        $region16: #{tpu_custom_call.1} parent=11 // pred_fallthru
          _
        // Predicated region
        $region17: #{tpu_custom_call.1} parent=11 // pred_check
          %p140 = pneg %p66
        $region18: #{tpu_custom_call.1} parent=11 // pred_check_branch
          %142 = sbr.rel (%p140) target = $region20
        $region19: #{tpu_custom_call.1} parent=11 // pred_region
          _
        $region20: #{tpu_custom_call.1} parent=11 // pred_fallthru
          _
      $region12: #{tpu_custom_call.1} parent=5 // pred_fallthru
        _
      %p143 = scmp.lt.s32.totalorder %s12, 2
      // Predicated region
      $region21: #{tpu_custom_call.1} parent=5 // pred_check
        %p144 = pneg %p143
      $region22: #{tpu_custom_call.1} parent=5 // pred_check_branch
        %146 = sbr.rel (%p144) target = $region24
      $region23: #{tpu_custom_call.1} parent=5 // pred_region
        // Predicated region
        $region25: #{tpu_custom_call.1} parent=23 // pred_check
          %p147 = pneg %p88
        $region26: #{tpu_custom_call.1} parent=23 // pred_check_branch
          %149 = sbr.rel (%p147) target = $region28
        $region27: #{tpu_custom_call.1} parent=23 // pred_region
          %s150 = smul.u32 2, %s20
          %p151 = scmp.lt.s32.totalorder %s19, 1
          %s152 = scalar_select %p151, %s19, 1
          %p153 = scmp.lt.s32.totalorder %s150, 1
          %s154 = scalar_select %p153, %s150, 1
          %s155 = smul.addr %s152, 2
          %s156 = sadd.s32 %s154, %s155
          %s157 = smul.addr %s156, 4
          %s158 = scalar_lea.vmem %s2, %s157
          %s159 = smul.u32 2, %s20
        $region28: #{tpu_custom_call.1} parent=23 // pred_fallthru
          _
      $region24: #{tpu_custom_call.1} parent=5 // pred_fallthru
        _
      %p160 = scmp.le.s32.totalorder 1, %s12
      %p161 = scmp.lt.s32.totalorder %s12, 3
      %p162 = pnand %p160, %p161
      %p163 = pneg %p162
      // Predicated region
      $region29: #{tpu_custom_call.1} parent=5 // pred_check
        _
      $region30: #{tpu_custom_call.1} parent=5 // pred_check_branch
        %165 = sbr.rel (%p162) target = $region32
      $region31: #{tpu_custom_call.1} parent=5 // pred_region
        %s166 = ssub.s32 %s12, 1
        %p167 = pneg %p45
        %p168 = pneg %p42
        %p169 = pneg %p66
        %p170 = pneg %p63
        %s171 = smul.u32 2, %s22
        %p172 = scmp.lt.s32.totalorder %s21, 1
        %s173 = scalar_select %p172, %s21, 1
        %p174 = scmp.lt.s32.totalorder %s171, 1
        %s175 = scalar_select %p174, %s171, 1
        %s176 = smul.addr %s173, 2
        %s177 = sadd.s32 %s175, %s176
        %s178 = smul.addr %s177, 4
        %s179 = scalar_lea.vmem %s2, %s178
        %p180 = pneg %p94
        %p181 = pneg %p91
        %p182 = pneg %p122
        %p183 = pneg %p119
        %s184 = sand.u32 %s109, 1
        %s185 = scalar_lea.sflag [#allocation3], %s184
        %s186 = sand.u32 %s109, 1
        %s187 = smul.addr %s186, 16
        %s188 = scalar_lea.vmem [#allocation2], %s187
        %s189 = smul.u32 2, %s22
        %p190 = scmp.lt.s32.totalorder %s21, 1
        %s191 = scalar_select %p190, %s21, 1
        %p192 = scmp.lt.s32.totalorder %s189, 1
        %s193 = scalar_select %p192, %s189, 1
        %s194 = smul.addr %s191, 2
        %s195 = sadd.s32 %s193, %s194
        %s196 = smul.addr %s195, 4
        %s197 = scalar_lea.vmem %s2, %s196
        %s198 = smul.u32 2, %s22
        %s199 = smul.u32 2, %s22
        %v200 = vld [vmem:[%s197] sm:$0xff]
        %v201 = vld [vmem:[%s0] sm:$0xff]
        %v202 = vld [vmem:[%s1] sm:$0xff]
        %204 = vset.pattern.permute.xlu0 0
        %205 = vperm.xlu0 %204, %v201
        %v206 = vpop.permute.xlu0 %205
        %v209 = vlaneseq
        %v210 = vshrl.u32 %v209, 7
        %v211 = vsub.s32 0, %v210
        %v212 = vrot.slane %v200, %v211
        %v213 = vlaneseq
        %v214 = vshrl.u32 %v213, 7
        %v215 = vsub.s32 4, %v214
        %v216 = vrot.slane %v200, %v215
        %v219 = vlaneseq
        %v220 = vshrl.u32 %v219, 7
        %v221 = vsub.s32 0, %v220
        %v222 = vrot.slane %v212, %v221
        %v223 = vlaneseq
        %v224 = vshrl.u32 %v223, 7
        %v225 = vsub.s32 0, %v224
        %v226 = vrot.slane %v216, %v225
        %v227 = vmul.f32 %v206, %v222
        %v228 = vmul.f32 %v206, %v226
        %229 = vset.pattern.permute.xlu0 1
        %230 = vperm.xlu0 %229, %v201
        %v231 = vpop.permute.xlu0 %230
        %v233 = vlaneseq
        %v234 = vshrl.u32 %v233, 7
        %v235 = vsub.s32 1, %v234
        %v236 = vrot.slane %v200, %v235
        %v237 = vlaneseq
        %v238 = vshrl.u32 %v237, 7
        %v239 = vsub.s32 5, %v238
        %v240 = vrot.slane %v200, %v239
        %v243 = vlaneseq
        %v244 = vshrl.u32 %v243, 7
        %v245 = vsub.s32 1, %v244
        %v246 = vrot.slane %v236, %v245
        %v247 = vlaneseq
        %v248 = vshrl.u32 %v247, 7
        %v249 = vsub.s32 1, %v248
        %v250 = vrot.slane %v240, %v249
        %v251 = vmul.f32 %v231, %v246
        %v252 = vmul.f32 %v231, %v250
        %v253 = vadd.f32 %v227, %v251
        %v254 = vadd.f32 %v228, %v252
        %255 = vset.pattern.permute.xlu0 2
        %256 = vperm.xlu0 %255, %v201
        %v257 = vpop.permute.xlu0 %256
        %v259 = vlaneseq
        %v260 = vshrl.u32 %v259, 7
        %v261 = vsub.s32 2, %v260
        %v262 = vrot.slane %v200, %v261
        %v263 = vlaneseq
        %v264 = vshrl.u32 %v263, 7
        %v265 = vsub.s32 6, %v264
        %v266 = vrot.slane %v200, %v265
        %v269 = vlaneseq
        %v270 = vshrl.u32 %v269, 7
        %v271 = vsub.s32 2, %v270
        %v272 = vrot.slane %v262, %v271
        %v273 = vlaneseq
        %v274 = vshrl.u32 %v273, 7
        %v275 = vsub.s32 2, %v274
        %v276 = vrot.slane %v266, %v275
        %v277 = vmul.f32 %v257, %v272
        %v278 = vmul.f32 %v257, %v276
        %v279 = vadd.f32 %v253, %v277
        %v280 = vadd.f32 %v254, %v278
        %281 = vset.pattern.permute.xlu0 3
        %282 = vperm.xlu0 %281, %v201
        %v283 = vpop.permute.xlu0 %282
        %v285 = vlaneseq
        %v286 = vshrl.u32 %v285, 7
        %v287 = vsub.s32 3, %v286
        %v288 = vrot.slane %v200, %v287
        %v289 = vlaneseq
        %v290 = vshrl.u32 %v289, 7
        %v291 = vsub.s32 7, %v290
        %v292 = vrot.slane %v200, %v291
        %v295 = vlaneseq
        %v296 = vshrl.u32 %v295, 7
        %v297 = vsub.s32 3, %v296
        %v298 = vrot.slane %v288, %v297
        %v299 = vlaneseq
        %v300 = vshrl.u32 %v299, 7
        %v301 = vsub.s32 3, %v300
        %v302 = vrot.slane %v292, %v301
        %v303 = vmul.f32 %v283, %v298
        %v304 = vmul.f32 %v283, %v302
        %v305 = vadd.f32 %v279, %v303
        %v306 = vadd.f32 %v280, %v304
        %308 = vset.pattern.permute.xlu0 0
        %309 = vperm.xlu0 %308, %v202
        %v310 = vpop.permute.xlu0 %309
        %v312 = vadd.f32 %v305, %v310
        %v313 = vadd.f32 %v306, %v310
        %314 = vst [vmem:[%s188] sm:$0xff] %v312
        %315 = vst [vmem:[%s188 + $0x8] sm:$0xff] %v313
        %s316 = sand.u32 %s109, 1
        %s317 = scalar_lea.sflag [#allocation3], %s316
        %s318 = sand.u32 %s109, 1
        %s319 = smul.addr %s318, 16
        %s320 = scalar_lea.vmem [#allocation2], %s319
        // Predicated region
        $region33: #{tpu_custom_call.1} parent=31 // pred_check
          %p321 = pneg %p119
        $region34: #{tpu_custom_call.1} parent=31 // pred_check_branch
          %323 = sbr.rel (%p321) target = $region36
        $region35: #{tpu_custom_call.1} parent=31 // pred_region
          %s324 = smul.u32 2, %s22
          %s326 = ssub.s32 256, 256
          %327 = vsyncadd %s317, %s326
          %s328 = smul.addr %s21, 2
          %s329 = sadd.s32 %s324, %s328
          %s330 = smul.addr %s329, 128
          %s331 = scalar_lea.hbm %s3, %s330
          %s333 = sshll.u32 %s320, 4
          %s334 = int_to_ptr.vmem [resolvable:$true] %s333
          %336 = dma.vmem_to_hbm [thread:$0]  %s334, 256, %s331, %s317
        $region36: #{tpu_custom_call.1} parent=31 // pred_fallthru
          _
      $region32: #{tpu_custom_call.1} parent=5 // pred_fallthru
        _
      %p337 = scmp.le.s32.totalorder 2, %s12
      // Predicated region
      $region37: #{tpu_custom_call.1} parent=5 // pred_check
        %p338 = pneg %p337
      $region38: #{tpu_custom_call.1} parent=5 // pred_check_branch
        %340 = sbr.rel (%p338) target = $region40
      $region39: #{tpu_custom_call.1} parent=5 // pred_region
        %s341 = ssub.s32 %s12, 2
        // Predicated region
        $region41: #{tpu_custom_call.1} parent=39 // pred_check
          %p342 = pneg %p125
        $region42: #{tpu_custom_call.1} parent=39 // pred_check_branch
          %344 = sbr.rel (%p342) target = $region44
        $region43: #{tpu_custom_call.1} parent=39 // pred_region
          %s345 = sand.u32 %s110, 1
          %s346 = scalar_lea.sflag [#allocation3], %s345
          %s347 = sand.u32 %s110, 1
          %s348 = smul.addr %s347, 16
          %s349 = scalar_lea.vmem [#allocation2], %s348
          %350 = dma.done %s346, 256
        $region44: #{tpu_custom_call.1} parent=39 // pred_fallthru
          _
      $region40: #{tpu_custom_call.1} parent=5 // pred_fallthru
        _
    $region6: #{tpu_custom_call.1} parent=1 // loop_footer
      %s16 = sadd.s32 1, %s12
    $region7: #{tpu_custom_call.1} parent=1 // loop_footer_branch
      %11 = sbr.rel target = $region3
    $region8: #{tpu_custom_call.1} parent=1 // loop_exit
      _
    %351 = vsyncpa [#allocation3], 1
    %s352 = scalar_lea.sflag [#allocation3], 1
    %353 = vsyncpa %s352, 1

</llo_original>
